<compile_context>
chip_gen: v7x
topology: tpu7x:2x2x1
jax: 0.10.0
libtpu: 0.0.40
codegen_flags: <defaults>
</compile_context>

<pallas_src>
import math
from functools import partial

import jax
import jax.numpy as jnp
from jax import lax
from jax.experimental import pallas as pl
from jax.experimental.pallas import tpu as pltpu


# ----------------------------------------------------------------------------- kernel


def make_kd_kernel(T, alpha, gamma, num_classes, hw, tile_hw, chunk, n_chunks,
                   tiles_per_split, needs_mask):
    T = float(T)
    inv_T = 1.0 / T
    alpha = float(alpha)
    gamma = float(gamma)
    C = int(num_classes)
    # small integer temperature -> reuse exp((x)/T) for the plain softmax (x**T)
    t_pow = int(T) if (T.is_integer() and 1.0 <= T <= 4.0) else None
    # small integer gamma -> repeated multiply instead of pow()
    g_pow = int(gamma) if (gamma.is_integer() and 0.0 <= gamma <= 8.0) else None

    def kernel(s_ref, t_ref, mse_ref, kl_ref, foc_ref, mse_acc, kl_acc, foc_acc):
        s_idx = pl.program_id(2)                      # spatial reduction axis (last)

        @pl.when(s_idx == 0)
        def _init():
            mse_acc[...] = jnp.zeros_like(mse_acc)
            kl_acc[...] = jnp.zeros_like(kl_acc)
            foc_acc[...] = jnp.zeros_like(foc_acc)

        # global spatial tile index (accounts for the parallel split axis)
        g_tile = pl.program_id(1) * tiles_per_split + s_idx

        def process_chunk(ci):
            if isinstance(ci, int):
                off = ci * chunk
            else:
                off = pl.multiple_of(ci * chunk, chunk)
            s = s_ref[:, pl.ds(off, chunk)].astype(jnp.float32)      # (C, L)
            t = t_ref[:, pl.ds(off, chunk)].astype(jnp.float32)      # (C, L)

            if needs_mask:
                lane = lax.broadcasted_iota(jnp.int32, (1, chunk), 1)
                valid = (g_tile * tile_hw + off + lane) < hw         # (1, L)
                # zero BEFORE exp/log so undefined tail lanes never produce Inf/NaN
                s = jnp.where(valid, s, 0.0)
                t = jnp.where(valid, t, 0.0)
                maskf = valid.astype(jnp.float32)
            else:
                maskf = None

            # ---- MSE partial: sum_c (s - t)^2, per lane ----
            d = s - t
            mse_lane = jnp.sum(d * d, axis=0, keepdims=True)         # (1, L)

            # shared centered logits (reused by KL and focal)
            s_max = jnp.max(s, axis=0, keepdims=True)
            t_max = jnp.max(t, axis=0, keepdims=True)
            s_c = s - s_max
            t_c = t - t_max

            # ---- temperature-KL partial ----
            # KL(col) = lseT(s) - lseT(t) - (1/T) * sum_c softmax(t/T)_c * (s_c - t_c)
            s_expT = jnp.exp(s_c * inv_T)
            t_expT = jnp.exp(t_c * inv_T)
            s_sumT = jnp.sum(s_expT, axis=0, keepdims=True)
            t_sumT = jnp.sum(t_expT, axis=0, keepdims=True)
            t_p = t_expT / t_sumT                                     # exact reciprocal
            bias = (s_max - t_max) * inv_T + jnp.log(s_sumT) - jnp.log(t_sumT)
            kl_lane = bias - inv_T * jnp.sum(t_p * d, axis=0, keepdims=True)

            # ---- focal partial: target = argmax_c teacher logits (first max),
            #      FL = -alpha * (1 - p_t)^gamma * log p_t,  p_t = softmax(student)[tgt]
            # TODO(synk): CategoricalFocalLoss source not provided; standard scalar-alpha
            #             per-pixel focal formulation (then .mean() outside) is assumed.
            if t_pow is not None:                 # exp(s_c) = exp(s_c/T)**T, T integer
                s_exp = s_expT
                for _ in range(t_pow - 1):
                    s_exp = s_exp * s_expT
            else:
                s_exp = jnp.exp(s_c)
            log_s_sum = jnp.log(jnp.sum(s_exp, axis=0, keepdims=True))   # lse - s_max

            cls = lax.broadcasted_iota(jnp.int32, s.shape, 0)         # (C, L)
            is_tmax = t == t_max
            target = jnp.min(jnp.where(is_tmax, cls, C), axis=0, keepdims=True)
            onehot = (cls == target).astype(jnp.float32)              # (C, L)
            s_at_t = jnp.sum(s_c * onehot, axis=0, keepdims=True)     # (1, L)
            logp_t = s_at_t - log_s_sum
            p_t = jnp.exp(logp_t)
            om = 1.0 - p_t
            if g_pow is not None:
                mod = jnp.ones_like(p_t)
                for _ in range(g_pow):
                    mod = mod * om
            else:
                mod = jnp.power(jnp.maximum(om, 0.0), gamma)
            focal_lane = (-alpha) * mod * logp_t                      # (1, L)

            if maskf is not None:
                mse_lane = mse_lane * maskf
                kl_lane = kl_lane * maskf
                focal_lane = focal_lane * maskf

            mse_acc[...] += mse_lane
            kl_acc[...] += kl_lane
            foc_acc[...] += focal_lane

        if n_chunks == 1:
            process_chunk(0)
        else:
            @pl.loop(0, n_chunks)
            def _chunks(ci):
                process_chunk(ci)

        @pl.when(s_idx == pl.num_programs(2) - 1)
        def _finalize():
            mse_ref[...] = jnp.sum(mse_acc[...]).reshape(mse_ref.shape)
            kl_ref[...] = jnp.sum(kl_acc[...]).reshape(kl_ref.shape)
            foc_ref[...] = jnp.sum(foc_acc[...]).reshape(foc_ref.shape)

    return kernel


# ----------------------------------------------------------------------------- wrapper


def _tpu_tile_config():
    """Generation-aware tile sizing. v5e/v6e: 128 MiB VMEM; v7x: 64 MiB/TC."""
    vmem_cap = None
    try:
        info = pltpu.get_tpu_info()
        for attr in ("vmem_capacity_bytes", "vmem_bytes", "vmem_size_bytes"):
            v = getattr(info, attr, None)
            if v:
                vmem_cap = int(v)
                break
    except Exception:
        vmem_cap = None
    if vmem_cap is not None and vmem_cap >= 100 * 1024 * 1024:
        # v5e / v6e: bigger streaming tiles, fewer grid steps, higher scoped VMEM limit.
        return dict(tile_hw_max=32768, tile_bytes_cap=8 * 1024 * 1024,
                    vmem_limit_bytes=64 * 1024 * 1024)
    # v7x (or unknown): conservative caps.
    return dict(tile_hw_max=8192, tile_bytes_cap=4 * 1024 * 1024,
                vmem_limit_bytes=32 * 1024 * 1024)


def kd_partial_losses(student_nchw, teacher_nchw, *, temperature, focal_alpha,
                      focal_gamma, tile_hw_max=None, chunk=None):
    """Returns scalar (mse_loss, kl_loss, focal_loss) matching the PyTorch semantics.

    Inputs may be f32 or bf16 (bf16 halves HBM traffic; upcast to f32 happens in VMEM).
    """
    assert student_nchw.shape == teacher_nchw.shape and student_nchw.ndim == 4
    B, C, H, W = student_nchw.shape
    HW = H * W
    # Free, contiguous reshape — no HBM transpose and no padding copy.
    s3 = student_nchw.reshape(B, C, HW)
    t3 = teacher_nchw.reshape(B, C, HW)

    cfg = _tpu_tile_config()
    if tile_hw_max is None:
        tile_hw_max = cfg["tile_hw_max"]
    tile_bytes_cap = cfg["tile_bytes_cap"]
    vmem_limit = cfg["vmem_limit_bytes"]

    # Lane-chunk the in-kernel math so the chain of (C, chunk) temporaries stays
    # vreg-resident (avoids vst/vld slot saturation at large DMA tiles).
    if chunk is None:
        chunk = min(512, max(128, -(-HW // 128) * 128))
    chunk = max(128, (chunk // 128) * 128)

    itemsize = jnp.dtype(s3.dtype).itemsize
    cap_lanes = max(chunk, (tile_bytes_cap // (C * itemsize)) // chunk * chunk)
    hw_ceil = -(-HW // chunk) * chunk
    tile_hw = max(chunk, min(tile_hw_max, cap_lanes, hw_ceil) // chunk * chunk)
    n_chunks = tile_hw // chunk
    n_tiles = -(-HW // tile_hw)

    # Dual-TC (v7x) occupancy: if B alone cannot fill both cores (B odd / B==1), add a
    # second parallel axis over spatial halves (only when it splits evenly).
    n_split = 2 if (B % 2 == 1 and n_tiles >= 2 and n_tiles % 2 == 0) else 1
    tiles_per_split = n_tiles // n_split
    needs_mask = (n_tiles * tile_hw != HW)

    kernel = make_kd_kernel(temperature, focal_alpha, focal_gamma, C, HW, tile_hw,
                            chunk, n_chunks, tiles_per_split, needs_mask)

    in_map = lambda b, p, s: (b, 0, p * tiles_per_split + s)
    out_map = lambda b, p, s: (b, p, 0)
    out_sds = jax.ShapeDtypeStruct((B, n_split, 1), jnp.float32)

    mse_p, kl_p, foc_p = pl.pallas_call(
        kernel,
        out_shape=(out_sds, out_sds, out_sds),
        grid_spec=pltpu.PrefetchScalarGridSpec(
            num_scalar_prefetch=0,
            grid=(B, n_split, tiles_per_split),
            in_specs=[pl.BlockSpec((None, C, tile_hw), in_map),
                      pl.BlockSpec((None, C, tile_hw), in_map)],
            out_specs=(pl.BlockSpec((1, 1, 1), out_map),
                       pl.BlockSpec((1, 1, 1), out_map),
                       pl.BlockSpec((1, 1, 1), out_map)),
            scratch_shapes=[pltpu.VMEM((1, chunk), jnp.float32),
                            pltpu.VMEM((1, chunk), jnp.float32),
                            pltpu.VMEM((1, chunk), jnp.float32)]),
        compiler_params=pltpu.CompilerParams(
            dimension_semantics=("parallel", "parallel", "arbitrary"),
            vmem_limit_bytes=vmem_limit),
    )(s3, t3)

    N = B * HW
    T = float(temperature)
    mse_loss = jnp.sum(mse_p) / (N * C)        # nn.MSELoss() mean over all elements
    kl_loss = jnp.sum(kl_p) / N * (T * T)      # KLDivLoss(batchmean) on (B*H*W, C) rows
    focal_loss = jnp.sum(foc_p) / N            # per-pixel focal, then .mean()
    return mse_loss, kl_loss, focal_loss


# --------------------------------------------------------------------- module port


class EMA:
    def __init__(self, momentum=0.9):
        self.momentum = momentum
        self.ema = None

    def update(self, x):
        self.ema = x if self.ema is None else self.momentum * x + (1 - self.momentum) * self.ema
        return self.ema


class KnowledgeDistillationLoss:
    """JAX/Pallas port of the PyTorch KnowledgeDistillationLoss forward pass."""

    # TODO(synk): the EMA scalers hold Python-side state; do not wrap __call__ in
    #             jax.jit or the adaptive scales become stale traced constants.

    def __init__(self, focal_alpha, focal_gamma, focal_num_classes,
                 temperature=2.0, lam_mse=0.5, lam_kl=0.5, lam_focal=0.2,
                 ema_momentum=0.9):
        self.temperature = temperature
        self.focal_alpha = focal_alpha
        self.focal_gamma = focal_gamma
        self.focal_num_classes = focal_num_classes
        self.lam_mse = lam_mse
        self.lam_kl = lam_kl
        self.lam_focal = lam_focal
        self.mse_scaler = EMA(ema_momentum) if ema_momentum is not None else None
        self.kl_scaler = EMA(ema_momentum) if ema_momentum is not None else None
        self.focal_scaler = EMA(ema_momentum) if ema_momentum is not None else None

    def __call__(self, student_logits, teacher_logits, returns_total_loss_only=True):
        mse_loss, kl_loss, focal_loss = kd_partial_losses(
            student_logits, teacher_logits,
            temperature=self.temperature,
            focal_alpha=self.focal_alpha,
            focal_gamma=self.focal_gamma)

        loss = jnp.float32(0.0)
        if self.lam_mse > 0:
            mse_scale = (self.mse_scaler.update(jnp.log1p(1.0 / lax.stop_gradient(mse_loss)))
                         if self.mse_scaler is not None else 1.0)
            loss = loss + self.lam_mse * mse_scale * mse_loss
        else:
            mse_loss = jnp.float32(0.0)
        if self.lam_kl > 0:
            kl_scale = (self.kl_scaler.update(jnp.log1p(1.0 / lax.stop_gradient(kl_loss)))
                        if self.kl_scaler is not None else 1.0)
            loss = loss + self.lam_kl * kl_scale * kl_loss
        else:
            kl_loss = jnp.float32(0.0)
        if self.lam_focal > 0:
            focal_scale = (self.focal_scaler.update(jnp.log1p(1.0 / lax.stop_gradient(focal_loss)))
                           if self.focal_scaler is not None else 1.0)
            loss = loss + self.lam_focal * focal_scale * focal_loss
        else:
            focal_loss = jnp.float32(0.0)

        return loss if returns_total_loss_only else (loss, mse_loss, kl_loss, focal_loss)


# ----------------------------------------------------------------------------- checks


def kd_reference(student, teacher, *, temperature, focal_alpha, focal_gamma):
    """Pure-JAX reference mirroring the PyTorch forward (for validation)."""
    s = student.astype(jnp.float32)
    t = teacher.astype(jnp.float32)
    B, C, H, W = s.shape
    T = float(temperature)
    mse = jnp.mean((s - t) ** 2)
    s_logpT = jax.nn.log_softmax(s / T, axis=1)
    t_pT = jax.nn.softmax(t / T, axis=1)
    t_logpT = jax.nn.log_softmax(t / T, axis=1)
    kl = jnp.sum(t_pT * (t_logpT - s_logpT)) / (B * H * W) * (T * T)
    tgt = jnp.argmax(t, axis=1)                                   # (B, H, W)
    logp = jax.nn.log_softmax(s, axis=1)
    logp_t = jnp.take_along_axis(logp, tgt[:, None], axis=1)[:, 0]
    p_t = jnp.exp(logp_t)
    focal = jnp.mean(-focal_alpha * (1.0 - p_t) ** focal_gamma * logp_t)
    return mse, kl, focal


if __name__ == "__main__":
    key = jax.random.PRNGKey(0)
    k1, k2, k3, k4 = jax.random.split(key, 4)

    # Case 1: small NCHW shapes consistent with the module (batch=2, classes=4, 16x16).
    B, C, H, W = 2, 4, 16, 16
    student = jax.random.normal(k1, (B, C, H, W), dtype=jnp.float32)
    teacher = jax.random.normal(k2, (B, C, H, W), dtype=jnp.float32)

    kd = KnowledgeDistillationLoss(
        focal_alpha=0.25, focal_gamma=2.0, focal_num_classes=C,
        temperature=2.0, lam_mse=0.5, lam_kl=0.5, lam_focal=0.2, ema_momentum=0.9)
    total, mse_l, kl_l, focal_l = kd(student, teacher, returns_total_loss_only=False)
    jax.block_until_ready((total, mse_l, kl_l, focal_l))

    mse_r, kl_r, foc_r = kd_reference(student, teacher, temperature=2.0,
                                      focal_alpha=0.25, focal_gamma=2.0)
    for name, got, ref in (("mse", mse_l, mse_r), ("kl", kl_l, kl_r),
                           ("focal", focal_l, foc_r)):
        assert jnp.allclose(got, ref, rtol=1e-3, atol=1e-5), \
            f"{name}: kernel={got} ref={ref}"

    # Case 2: odd batch + non-multiple spatial + bf16 inputs — exercises the masked
    # partial-trailing-block, lane-chunk loop, and dual-TC spatial-split paths.
    B2, C2, H2, W2 = 1, 4, 40, 40
    s2 = jax.random.normal(k3, (B2, C2, H2, W2), dtype=jnp.float32).astype(jnp.bfloat16)
    t2 = jax.random.normal(k4, (B2, C2, H2, W2), dtype=jnp.float32).astype(jnp.bfloat16)
    mse2, kl2, foc2 = kd_partial_losses(s2, t2, temperature=2.0, focal_alpha=0.25,
                                        focal_gamma=2.0, tile_hw_max=1024)
    jax.block_until_ready((mse2, kl2, foc2))
    mse2r, kl2r, foc2r = kd_reference(s2, t2, temperature=2.0, focal_alpha=0.25,
                                      focal_gamma=2.0)
    for name, got, ref in (("mse2", mse2, mse2r), ("kl2", kl2, kl2r),
                           ("focal2", foc2, foc2r)):
        assert jnp.allclose(got, ref, rtol=1e-3, atol=1e-5), \
            f"{name}: kernel={got} ref={ref}"

    print("KERNEL_OK")
</pallas_src>

<mosaic_0001>
module attributes {stable_mosaic.version = 11 : i64} {
  func.func @kernel(%arg0: i32, %arg1: i32, %arg2: i32, %arg3: memref<1x4x256xf32, #tpu.memory_space<vmem>>, %arg4: memref<1x4x256xf32, #tpu.memory_space<vmem>>, %arg5: memref<1x1x1xf32, #tpu.memory_space<vmem>>, %arg6: memref<1x1x1xf32, #tpu.memory_space<vmem>>, %arg7: memref<1x1x1xf32, #tpu.memory_space<vmem>>, %arg8: memref<1x256xf32, #tpu.memory_space<vmem>>, %arg9: memref<1x256xf32, #tpu.memory_space<vmem>>, %arg10: memref<1x256xf32, #tpu.memory_space<vmem>>) attributes {dimension_semantics = [#tpu.dimension_semantics<parallel>, #tpu.dimension_semantics<parallel>, #tpu.dimension_semantics<arbitrary>], iteration_bounds = array<i64: 2, 1, 1>, scalar_prefetch = 0 : i64, scratch_operands = 3 : i64, tpu.core_type = #tpu.core_type<tc>, window_params = [{transform_indices = @transform_0, window_bounds = array<i64: 1, 4, 256>}, {transform_indices = @transform_1, window_bounds = array<i64: 1, 4, 256>}, {transform_indices = @transform_2, window_bounds = array<i64: 1, 1, 1>}, {transform_indices = @transform_3, window_bounds = array<i64: 1, 1, 1>}, {transform_indices = @transform_4, window_bounds = array<i64: 1, 1, 1>}]} {
    %c0_i32 = arith.constant 0 : i32
    %0 = arith.cmpi eq, %arg2, %c0_i32 : i32
    %1 = arith.extui %0 : i1 to i32
    %c0_i32_0 = arith.constant 0 : i32
    %2 = arith.cmpi ne, %1, %c0_i32_0 : i32
    scf.if %2 {
      %cst_35 = arith.constant 0.000000e+00 : f32
      %84 = vector.broadcast %cst_35 : f32 to vector<1x256xf32>
      %c0_36 = arith.constant 0 : index
      %c0_37 = arith.constant 0 : index
      %85 = vector.load %arg8[%c0_36, %c0_37] : memref<1x256xf32, #tpu.memory_space<vmem>>, vector<1x256xf32>
      tpu.vector_store %arg8[%c0_36, %c0_37], %84 {strides = array<i32>} : memref<1x256xf32, #tpu.memory_space<vmem>>, vector<1x256xf32>,
      %cst_38 = arith.constant 0.000000e+00 : f32
      %86 = vector.broadcast %cst_38 : f32 to vector<1x256xf32>
      %c0_39 = arith.constant 0 : index
      %c0_40 = arith.constant 0 : index
      %87 = vector.load %arg9[%c0_39, %c0_40] : memref<1x256xf32, #tpu.memory_space<vmem>>, vector<1x256xf32>
      tpu.vector_store %arg9[%c0_39, %c0_40], %86 {strides = array<i32>} : memref<1x256xf32, #tpu.memory_space<vmem>>, vector<1x256xf32>,
      %cst_41 = arith.constant 0.000000e+00 : f32
      %88 = vector.broadcast %cst_41 : f32 to vector<1x256xf32>
      %c0_42 = arith.constant 0 : index
      %c0_43 = arith.constant 0 : index
      %89 = vector.load %arg10[%c0_42, %c0_43] : memref<1x256xf32, #tpu.memory_space<vmem>>, vector<1x256xf32>
      tpu.vector_store %arg10[%c0_42, %c0_43], %88 {strides = array<i32>} : memref<1x256xf32, #tpu.memory_space<vmem>>, vector<1x256xf32>,
    } else {
    }
    %c0 = arith.constant 0 : index
    %c0_1 = arith.constant 0 : index
    %c0_2 = arith.constant 0 : index
    %3 = vector.load %arg3[%c0, %c0_1, %c0_2] : memref<1x4x256xf32, #tpu.memory_space<vmem>>, vector<1x4x256xf32>
    %4 = vector.shape_cast %3 : vector<1x4x256xf32> to vector<4x256xf32>
    %c0_3 = arith.constant 0 : index
    %c0_4 = arith.constant 0 : index
    %c0_5 = arith.constant 0 : index
    %5 = vector.load %arg4[%c0_3, %c0_4, %c0_5] : memref<1x4x256xf32, #tpu.memory_space<vmem>>, vector<1x4x256xf32>
    %6 = vector.shape_cast %5 : vector<1x4x256xf32> to vector<4x256xf32>
    %7 = arith.subf %4, %6 : vector<4x256xf32>
    %8 = arith.mulf %7, %7 : vector<4x256xf32>
    %cst = arith.constant dense<0.000000e+00> : vector<256xf32>
    %9 = vector.multi_reduction <add>, %8, %cst [0] : vector<4x256xf32> to vector<256xf32>
    %10 = vector.shape_cast %9 : vector<256xf32> to vector<1x256xf32>
    %cst_6 = arith.constant dense<0xFF800000> : vector<256xf32>
    %11 = vector.multi_reduction <maximumf>, %4, %cst_6 [0] : vector<4x256xf32> to vector<256xf32>
    %12 = vector.shape_cast %11 : vector<256xf32> to vector<1x256xf32>
    %cst_7 = arith.constant dense<0xFF800000> : vector<256xf32>
    %13 = vector.multi_reduction <maximumf>, %6, %cst_7 [0] : vector<4x256xf32> to vector<256xf32>
    %14 = vector.shape_cast %13 : vector<256xf32> to vector<1x256xf32>
    %15 = vector.broadcast %12 : vector<1x256xf32> to vector<4x256xf32>
    %16 = arith.subf %4, %15 : vector<4x256xf32>
    %17 = vector.broadcast %14 : vector<1x256xf32> to vector<4x256xf32>
    %18 = arith.subf %6, %17 : vector<4x256xf32>
    %cst_8 = arith.constant 5.000000e-01 : f32
    %19 = vector.broadcast %cst_8 : f32 to vector<4x256xf32>
    %20 = arith.mulf %16, %19 : vector<4x256xf32>
    %21 = math.exp %20 : vector<4x256xf32>
    %cst_9 = arith.constant 5.000000e-01 : f32
    %22 = vector.broadcast %cst_9 : f32 to vector<4x256xf32>
    %23 = arith.mulf %18, %22 : vector<4x256xf32>
    %24 = math.exp %23 : vector<4x256xf32>
    %cst_10 = arith.constant dense<0.000000e+00> : vector<256xf32>
    %25 = vector.multi_reduction <add>, %21, %cst_10 [0] : vector<4x256xf32> to vector<256xf32>
    %26 = vector.shape_cast %25 : vector<256xf32> to vector<1x256xf32>
    %cst_11 = arith.constant dense<0.000000e+00> : vector<256xf32>
    %27 = vector.multi_reduction <add>, %24, %cst_11 [0] : vector<4x256xf32> to vector<256xf32>
    %28 = vector.shape_cast %27 : vector<256xf32> to vector<1x256xf32>
    %29 = vector.broadcast %28 : vector<1x256xf32> to vector<4x256xf32>
    %30 = arith.divf %24, %29 : vector<4x256xf32>
    %31 = arith.subf %12, %14 : vector<1x256xf32>
    %cst_12 = arith.constant 5.000000e-01 : f32
    %32 = vector.broadcast %cst_12 : f32 to vector<1x256xf32>
    %33 = arith.mulf %31, %32 : vector<1x256xf32>
    %34 = math.log %26 : vector<1x256xf32>
    %35 = arith.addf %33, %34 : vector<1x256xf32>
    %36 = math.log %28 : vector<1x256xf32>
    %37 = arith.subf %35, %36 : vector<1x256xf32>
    %38 = arith.mulf %30, %7 : vector<4x256xf32>
    %cst_13 = arith.constant dense<0.000000e+00> : vector<256xf32>
    %39 = vector.multi_reduction <add>, %38, %cst_13 [0] : vector<4x256xf32> to vector<256xf32>
    %40 = vector.shape_cast %39 : vector<256xf32> to vector<1x256xf32>
    %cst_14 = arith.constant 5.000000e-01 : f32
    %41 = vector.broadcast %cst_14 : f32 to vector<1x256xf32>
    %42 = arith.mulf %41, %40 : vector<1x256xf32>
    %43 = arith.subf %37, %42 : vector<1x256xf32>
    %44 = arith.mulf %21, %21 : vector<4x256xf32>
    %cst_15 = arith.constant dense<0.000000e+00> : vector<256xf32>
    %45 = vector.multi_reduction <add>, %44, %cst_15 [0] : vector<4x256xf32> to vector<256xf32>
    %46 = vector.shape_cast %45 : vector<256xf32> to vector<1x256xf32>
    %47 = math.log %46 : vector<1x256xf32>
    %48 = tpu.iota {dimensions = array<i32: 0>} : vector<4x256xi32>
    %49 = vector.broadcast %14 : vector<1x256xf32> to vector<4x256xf32>
    %50 = arith.cmpf oeq, %6, %49 : vector<4x256xf32>
    %c4_i32 = arith.constant 4 : i32
    %51 = vector.broadcast %c4_i32 : i32 to vector<4x256xi32>
    %52 = arith.select %50, %48, %51 : vector<4x256xi1>, vector<4x256xi32>
    %cst_16 = arith.constant dense<2147483647> : vector<256xi32>
    %53 = vector.multi_reduction <minsi>, %52, %cst_16 [0] : vector<4x256xi32> to vector<256xi32>
    %54 = vector.shape_cast %53 : vector<256xi32> to vector<1x256xi32>
    %55 = vector.broadcast %54 : vector<1x256xi32> to vector<4x256xi32>
    %56 = arith.cmpi eq, %48, %55 : vector<4x256xi32>
    %57 = arith.extui %56 : vector<4x256xi1> to vector<4x256xi32>
    %58 = arith.sitofp %57 : vector<4x256xi32> to vector<4x256xf32>
    %59 = arith.mulf %16, %58 : vector<4x256xf32>
    %cst_17 = arith.constant dense<0.000000e+00> : vector<256xf32>
    %60 = vector.multi_reduction <add>, %59, %cst_17 [0] : vector<4x256xf32> to vector<256xf32>
    %61 = vector.shape_cast %60 : vector<256xf32> to vector<1x256xf32>
    %62 = arith.subf %61, %47 : vector<1x256xf32>
    %63 = math.exp %62 : vector<1x256xf32>
    %cst_18 = arith.constant 1.000000e+00 : f32
    %64 = vector.broadcast %cst_18 : f32 to vector<1x256xf32>
    %65 = arith.subf %64, %63 : vector<1x256xf32>
    %cst_19 = arith.constant 1.000000e+00 : f32
    %66 = vector.broadcast %cst_19 : f32 to vector<1x256xf32>
    %67 = arith.mulf %66, %65 : vector<1x256xf32>
    %68 = arith.mulf %67, %65 : vector<1x256xf32>
    %cst_20 = arith.constant -2.500000e-01 : f32
    %69 = vector.broadcast %cst_20 : f32 to vector<1x256xf32>
    %70 = arith.mulf %69, %68 : vector<1x256xf32>
    %71 = arith.mulf %70, %62 : vector<1x256xf32>
    %c0_21 = arith.constant 0 : index
    %c0_22 = arith.constant 0 : index
    %72 = vector.load %arg8[%c0_21, %c0_22] : memref<1x256xf32, #tpu.memory_space<vmem>>, vector<1x256xf32>
    %73 = arith.addf %72, %10 : vector<1x256xf32>
    %c0_23 = arith.constant 0 : index
    %c0_24 = arith.constant 0 : index
    %74 = vector.load %arg8[%c0_23, %c0_24] : memref<1x256xf32, #tpu.memory_space<vmem>>, vector<1x256xf32>
    tpu.vector_store %arg8[%c0_23, %c0_24], %73 {strides = array<i32>} : memref<1x256xf32, #tpu.memory_space<vmem>>, vector<1x256xf32>,
    %c0_25 = arith.constant 0 : index
    %c0_26 = arith.constant 0 : index
    %75 = vector.load %arg9[%c0_25, %c0_26] : memref<1x256xf32, #tpu.memory_space<vmem>>, vector<1x256xf32>
    %76 = arith.addf %75, %43 : vector<1x256xf32>
    %c0_27 = arith.constant 0 : index
    %c0_28 = arith.constant 0 : index
    %77 = vector.load %arg9[%c0_27, %c0_28] : memref<1x256xf32, #tpu.memory_space<vmem>>, vector<1x256xf32>
    tpu.vector_store %arg9[%c0_27, %c0_28], %76 {strides = array<i32>} : memref<1x256xf32, #tpu.memory_space<vmem>>, vector<1x256xf32>,
    %c0_29 = arith.constant 0 : index
    %c0_30 = arith.constant 0 : index
    %78 = vector.load %arg10[%c0_29, %c0_30] : memref<1x256xf32, #tpu.memory_space<vmem>>, vector<1x256xf32>
    %79 = arith.addf %78, %71 : vector<1x256xf32>
    %c0_31 = arith.constant 0 : index
    %c0_32 = arith.constant 0 : index
    %80 = vector.load %arg10[%c0_31, %c0_32] : memref<1x256xf32, #tpu.memory_space<vmem>>, vector<1x256xf32>
    tpu.vector_store %arg10[%c0_31, %c0_32], %79 {strides = array<i32>} : memref<1x256xf32, #tpu.memory_space<vmem>>, vector<1x256xf32>,
    %c0_i32_33 = arith.constant 0 : i32
    %81 = arith.cmpi eq, %arg2, %c0_i32_33 : i32
    %82 = arith.extui %81 : i1 to i32
    %c0_i32_34 = arith.constant 0 : i32
    %83 = arith.cmpi ne, %82, %c0_i32_34 : i32
    scf.if %83 {
      %c0_35 = arith.constant 0 : index
      %c0_36 = arith.constant 0 : index
      %84 = vector.load %arg8[%c0_35, %c0_36] : memref<1x256xf32, #tpu.memory_space<vmem>>, vector<1x256xf32>
      %85 = vector.shape_cast %84 : vector<1x256xf32> to vector<1x1x256xf32>
      %cst_37 = arith.constant dense<0.000000e+00> : vector<1xf32>
      %86 = vector.multi_reduction <add>, %85, %cst_37 [1, 2] : vector<1x1x256xf32> to vector<1xf32>
      %87 = vector.shape_cast %86 : vector<1xf32> to vector<1x1x1xf32>
      %88 = vector.extract %87[0, 0, 0] : f32 from vector<1x1x1xf32>
      %89 = vector.broadcast %88 : f32 to vector<1x1x1xf32>
      %c0_38 = arith.constant 0 : index
      %c0_39 = arith.constant 0 : index
      %c0_40 = arith.constant 0 : index
      %90 = vector.load %arg5[%c0_38, %c0_39, %c0_40] : memref<1x1x1xf32, #tpu.memory_space<vmem>>, vector<1x1x1xf32>
      tpu.vector_store %arg5[%c0_38, %c0_39, %c0_40], %89 {strides = array<i32>} : memref<1x1x1xf32, #tpu.memory_space<vmem>>, vector<1x1x1xf32>,
      %c0_41 = arith.constant 0 : index
      %c0_42 = arith.constant 0 : index
      %91 = vector.load %arg9[%c0_41, %c0_42] : memref<1x256xf32, #tpu.memory_space<vmem>>, vector<1x256xf32>
      %92 = vector.shape_cast %91 : vector<1x256xf32> to vector<1x1x256xf32>
      %cst_43 = arith.constant dense<0.000000e+00> : vector<1xf32>
      %93 = vector.multi_reduction <add>, %92, %cst_43 [1, 2] : vector<1x1x256xf32> to vector<1xf32>
      %94 = vector.shape_cast %93 : vector<1xf32> to vector<1x1x1xf32>
      %95 = vector.extract %94[0, 0, 0] : f32 from vector<1x1x1xf32>
      %96 = vector.broadcast %95 : f32 to vector<1x1x1xf32>
      %c0_44 = arith.constant 0 : index
      %c0_45 = arith.constant 0 : index
      %c0_46 = arith.constant 0 : index
      %97 = vector.load %arg6[%c0_44, %c0_45, %c0_46] : memref<1x1x1xf32, #tpu.memory_space<vmem>>, vector<1x1x1xf32>
      tpu.vector_store %arg6[%c0_44, %c0_45, %c0_46], %96 {strides = array<i32>} : memref<1x1x1xf32, #tpu.memory_space<vmem>>, vector<1x1x1xf32>,
      %c0_47 = arith.constant 0 : index
      %c0_48 = arith.constant 0 : index
      %98 = vector.load %arg10[%c0_47, %c0_48] : memref<1x256xf32, #tpu.memory_space<vmem>>, vector<1x256xf32>
      %99 = vector.shape_cast %98 : vector<1x256xf32> to vector<1x1x256xf32>
      %cst_49 = arith.constant dense<0.000000e+00> : vector<1xf32>
      %100 = vector.multi_reduction <add>, %99, %cst_49 [1, 2] : vector<1x1x256xf32> to vector<1xf32>
      %101 = vector.shape_cast %100 : vector<1xf32> to vector<1x1x1xf32>
      %102 = vector.extract %101[0, 0, 0] : f32 from vector<1x1x1xf32>
      %103 = vector.broadcast %102 : f32 to vector<1x1x1xf32>
      %c0_50 = arith.constant 0 : index
      %c0_51 = arith.constant 0 : index
      %c0_52 = arith.constant 0 : index
      %104 = vector.load %arg7[%c0_50, %c0_51, %c0_52] : memref<1x1x1xf32, #tpu.memory_space<vmem>>, vector<1x1x1xf32>
      tpu.vector_store %arg7[%c0_50, %c0_51, %c0_52], %103 {strides = array<i32>} : memref<1x1x1xf32, #tpu.memory_space<vmem>>, vector<1x1x1xf32>,
    } else {
    }
    return
  }
  func.func @transform_0(%arg0: i32, %arg1: i32, %arg2: i32) -> (i32, i32, i32) {
    %c1_i32 = arith.constant 1 : i32
    %0 = arith.muli %arg1, %c1_i32 : i32
    %1 = arith.addi %0, %arg2 : i32
    %c0_i32 = arith.constant 0 : i32
    %c0_i32_0 = arith.constant 0 : i32
    return %arg0, %c0_i32, %1 : i32, i32, i32
  }
  func.func @transform_1(%arg0: i32, %arg1: i32, %arg2: i32) -> (i32, i32, i32) {
    %c1_i32 = arith.constant 1 : i32
    %0 = arith.muli %arg1, %c1_i32 : i32
    %1 = arith.addi %0, %arg2 : i32
    %c0_i32 = arith.constant 0 : i32
    %c0_i32_0 = arith.constant 0 : i32
    return %arg0, %c0_i32, %1 : i32, i32, i32
  }
  func.func @transform_2(%arg0: i32, %arg1: i32, %arg2: i32) -> (i32, i32, i32) {
    %c0_i32 = arith.constant 0 : i32
    %c0_i32_0 = arith.constant 0 : i32
    return %arg0, %arg1, %c0_i32 : i32, i32, i32
  }
  func.func @transform_3(%arg0: i32, %arg1: i32, %arg2: i32) -> (i32, i32, i32) {
    %c0_i32 = arith.constant 0 : i32
    %c0_i32_0 = arith.constant 0 : i32
    return %arg0, %arg1, %c0_i32 : i32, i32, i32
  }
  func.func @transform_4(%arg0: i32, %arg1: i32, %arg2: i32) -> (i32, i32, i32) {
    %c0_i32 = arith.constant 0 : i32
    %c0_i32_0 = arith.constant 0 : i32
    return %arg0, %arg1, %c0_i32 : i32, i32, i32
  }
}

</mosaic_0001>

<llo_original>
// kernel: tpu_custom_call.1
$region0: #{tpu_custom_call.1}
  #allocation0 [shape = 'u32[]', space=smem, size = 0x4, offset = 0x4, fixed_abs, tag = 'smem constant byte address 0x4 - core index']
  #allocation1 [shape = 'u32[144,128]{1,0:T(1,128)}', space=vmem, size = 0x12000, scoped, tag = 'internal scratch']
  #allocation2 [shape = 'f32[1,256]{1,0:T(1,128)}', space=vmem, size = 0x400, scoped, tag = 'scratch operand']
  #allocation3 [shape = 'f32[1,256]{1,0:T(1,128)}', space=vmem, size = 0x400, scoped, tag = 'scratch operand']
  #allocation4 [shape = 'f32[1,256]{1,0:T(1,128)}', space=vmem, size = 0x400, scoped, tag = 'scratch operand']
  %s0 = inlined_call_operand.hbm [shape: f32[2,4,256], index: 0, kind: input, shape index: {}]
  %s1 = inlined_call_operand.hbm [shape: f32[2,4,256], index: 1, kind: input, shape index: {}]
  %s2 = inlined_call_operand.vmem [shape: f32[2,1,1], index: 2, kind: output, shape index: {0}]
  %s3 = inlined_call_operand.vmem [shape: f32[2,1,1], index: 3, kind: output, shape index: {1}]
  %s4 = inlined_call_operand.vmem [shape: f32[2,1,1], index: 4, kind: output, shape index: {2}]
  %5 = xla_tuple %s2, %s3, %s4
  %s6 = sld [smem:[#allocation0]]
  $region73: #{tpu_custom_call.1} parent=0
    _
  %s8 = ssub.s32 1, %s6
  %s9 = scalar_select 0, %s8, %s6
  $region1: #{tpu_custom_call.1} parent=0
    #allocation5 [shape = 'u8[8192]{0}', space=vmem, size = 0x2000, scoped, tag = 'input window, operand 0']
    #allocation6 [shape = 's32[2]{0}', space=sflag, size = 0x8, scoped, tag = 'scoped memory for tpu_custom_call.1']
    #allocation7 [shape = 'u8[8192]{0}', space=vmem, size = 0x2000, scoped, tag = 'input window, operand 1']
    #allocation8 [shape = 's32[2]{0}', space=sflag, size = 0x8, scoped, tag = 'scoped memory for tpu_custom_call.1']
    %10 = vsyncpa [#allocation6], 0
    %s11 = scalar_lea.sflag [#allocation6], 1
    %12 = vsyncpa %s11, 0
    %13 = vsyncpa [#allocation8], 0
    %s14 = scalar_lea.sflag [#allocation8], 1
    %15 = vsyncpa %s14, 0
    loop: start=0, step=1, limit=4
    $region2: #{tpu_custom_call.1} parent=1 // loop_pre_header
      _
    $region3: #{tpu_custom_call.1} parent=1 // loop_header
      %s17 = sphi 0, %s21
      %p18 = scmp.ge.s32.totalorder %s17, 4
      %s24 = sphi 0, %s43
      %s25 = sphi 0, %s39
      %s26 = sphi 0, %s35
      %s27 = sphi 0, %s24
      %s28 = sphi 0, %s25
      %s29 = sphi 0, %s26
      %s30 = sphi 0, %s27
      %s31 = sphi 0, %s28
      %s32 = sphi 0, %s29
      %s50 = sphi 0, %s52
      %s53 = sphi 0, %s50
      %s54 = sphi 0, %s53
      %s70 = sphi 0, %s54
      %s80 = sphi 0, %s82
      %s83 = sphi 0, %s80
      %s84 = sphi 0, %s83
      %s100 = sphi 0, %s84
      %s108 = sphi 0, %s110
      %s111 = sphi 0, %s108
      %s112 = sphi 0, %s111
      %s128 = sphi 0, %s112
      %s136 = sphi 0, %s138
      %s139 = sphi 0, %s136
      %s140 = sphi 0, %s139
      %s156 = sphi 0, %s140
      %s164 = sphi 0, %s166
      %s167 = sphi 0, %s164
      %s168 = sphi 0, %s167
      %s184 = sphi 0, %s168
    $region4: #{tpu_custom_call.1} parent=1 // loop_header_branch
      %20 = sbr.rel (%p18) target = $region8
    $region5: #{tpu_custom_call.1} parent=1 // loop_body
      %s22 = ssub.s32 %s17, 1
      %s23 = ssub.s32 %s17, 2
      %s33 = sadd.s32 1, %s26
      %p34 = scmp.ge.s32.totalorder %s33, 1
      %s35 = scalar_select %p34, 0, %s33
      %s36 = sadd.s32 1, %s25
      %s37 = scalar_select %p34, %s36, %s25
      %p38 = scmp.ge.s32.totalorder %s37, 1
      %s39 = scalar_select %p38, 0, %s37
      %s40 = sadd.s32 1, %s24
      %s41 = scalar_select %p38, %s40, %s24
      %p42 = scmp.ge.s32.totalorder %s41, 2
      %s43 = scalar_select %p42, 0, %s41
      %s44 = sadd.s32 %s25, %s26
      %s45 = sadd.s32 %s39, %s35
      %s46 = ssub.s32 %s24, %s43
      %s47 = ssub.s32 %s44, %s45
      %s48 = sor.u32 %s46, %s47
      %p49 = scmp.eq.s32.totalorder %s48, 0
      %s51 = sadd.s32 %s50, 1
      %s52 = scalar_select %p49, %s50, %s51
      %p55 = pneg %p49
      %p56 = scmp.eq.s32.totalorder %s17, 1
      %p57 = por %p55, %p56
      %p58 = scmp.ne.s32.totalorder %s50, %s53
      %p59 = scmp.eq.s32.totalorder %s17, 0
      %p60 = por %p58, %p59
      %p61 = scmp.ne.s32.totalorder %s50, %s53
      %p62 = scmp.eq.s32.totalorder %s22, 1
      %p63 = por %p61, %p62
      %p64 = scmp.ne.s32.totalorder %s53, %s54
      %p65 = scmp.eq.s32.totalorder %s22, 0
      %p66 = por %p64, %p65
      %p67 = scmp.ne.s32.totalorder %s53, %s54
      %p68 = scmp.eq.s32.totalorder %s23, 1
      %p69 = por %p67, %p68
      %p71 = scmp.ne.s32.totalorder %s54, %s70
      %p72 = scmp.eq.s32.totalorder %s23, 0
      %p73 = por %p71, %p72
      %s74 = sadd.s32 %s25, %s26
      %s75 = sadd.s32 %s39, %s35
      %s76 = ssub.s32 %s24, %s43
      %s77 = ssub.s32 %s74, %s75
      %s78 = sor.u32 %s76, %s77
      %p79 = scmp.eq.s32.totalorder %s78, 0
      %s81 = sadd.s32 %s80, 1
      %s82 = scalar_select %p79, %s80, %s81
      %p85 = pneg %p79
      %p86 = scmp.eq.s32.totalorder %s17, 1
      %p87 = por %p85, %p86
      %p88 = scmp.ne.s32.totalorder %s80, %s83
      %p89 = scmp.eq.s32.totalorder %s17, 0
      %p90 = por %p88, %p89
      %p91 = scmp.ne.s32.totalorder %s80, %s83
      %p92 = scmp.eq.s32.totalorder %s22, 1
      %p93 = por %p91, %p92
      %p94 = scmp.ne.s32.totalorder %s83, %s84
      %p95 = scmp.eq.s32.totalorder %s22, 0
      %p96 = por %p94, %p95
      %p97 = scmp.ne.s32.totalorder %s83, %s84
      %p98 = scmp.eq.s32.totalorder %s23, 1
      %p99 = por %p97, %p98
      %p101 = scmp.ne.s32.totalorder %s84, %s100
      %p102 = scmp.eq.s32.totalorder %s23, 0
      %p103 = por %p101, %p102
      %s104 = ssub.s32 %s24, %s43
      %s105 = ssub.s32 %s25, %s39
      %s106 = sor.u32 %s104, %s105
      %p107 = scmp.eq.s32.totalorder %s106, 0
      %s109 = sadd.s32 %s108, 1
      %s110 = scalar_select %p107, %s108, %s109
      %p113 = pneg %p107
      %p114 = scmp.eq.s32.totalorder %s17, 1
      %p115 = por %p113, %p114
      %p116 = scmp.ne.s32.totalorder %s108, %s111
      %p117 = scmp.eq.s32.totalorder %s17, 0
      %p118 = por %p116, %p117
      %p119 = scmp.ne.s32.totalorder %s108, %s111
      %p120 = scmp.eq.s32.totalorder %s22, 1
      %p121 = por %p119, %p120
      %p122 = scmp.ne.s32.totalorder %s111, %s112
      %p123 = scmp.eq.s32.totalorder %s22, 0
      %p124 = por %p122, %p123
      %p125 = scmp.ne.s32.totalorder %s111, %s112
      %p126 = scmp.eq.s32.totalorder %s23, 1
      %p127 = por %p125, %p126
      %p129 = scmp.ne.s32.totalorder %s112, %s128
      %p130 = scmp.eq.s32.totalorder %s23, 0
      %p131 = por %p129, %p130
      %s132 = ssub.s32 %s24, %s43
      %s133 = ssub.s32 %s25, %s39
      %s134 = sor.u32 %s132, %s133
      %p135 = scmp.eq.s32.totalorder %s134, 0
      %s137 = sadd.s32 %s136, 1
      %s138 = scalar_select %p135, %s136, %s137
      %p141 = pneg %p135
      %p142 = scmp.eq.s32.totalorder %s17, 1
      %p143 = por %p141, %p142
      %p144 = scmp.ne.s32.totalorder %s136, %s139
      %p145 = scmp.eq.s32.totalorder %s17, 0
      %p146 = por %p144, %p145
      %p147 = scmp.ne.s32.totalorder %s136, %s139
      %p148 = scmp.eq.s32.totalorder %s22, 1
      %p149 = por %p147, %p148
      %p150 = scmp.ne.s32.totalorder %s139, %s140
      %p151 = scmp.eq.s32.totalorder %s22, 0
      %p152 = por %p150, %p151
      %p153 = scmp.ne.s32.totalorder %s139, %s140
      %p154 = scmp.eq.s32.totalorder %s23, 1
      %p155 = por %p153, %p154
      %p157 = scmp.ne.s32.totalorder %s140, %s156
      %p158 = scmp.eq.s32.totalorder %s23, 0
      %p159 = por %p157, %p158
      %s160 = ssub.s32 %s24, %s43
      %s161 = ssub.s32 %s25, %s39
      %s162 = sor.u32 %s160, %s161
      %p163 = scmp.eq.s32.totalorder %s162, 0
      %s165 = sadd.s32 %s164, 1
      %s166 = scalar_select %p163, %s164, %s165
      %p169 = pneg %p163
      %p170 = scmp.eq.s32.totalorder %s17, 1
      %p171 = por %p169, %p170
      %p172 = scmp.ne.s32.totalorder %s164, %s167
      %p173 = scmp.eq.s32.totalorder %s17, 0
      %p174 = por %p172, %p173
      %p175 = scmp.ne.s32.totalorder %s164, %s167
      %p176 = scmp.eq.s32.totalorder %s22, 1
      %p177 = por %p175, %p176
      %p178 = scmp.ne.s32.totalorder %s167, %s168
      %p179 = scmp.eq.s32.totalorder %s22, 0
      %p180 = por %p178, %p179
      %p181 = scmp.ne.s32.totalorder %s167, %s168
      %p182 = scmp.eq.s32.totalorder %s23, 1
      %p183 = por %p181, %p182
      %p185 = scmp.ne.s32.totalorder %s168, %s184
      %p186 = scmp.eq.s32.totalorder %s23, 0
      %p187 = por %p185, %p186
      %p188 = scmp.le.s32.totalorder 1, %s17
      %p189 = scmp.lt.s32.totalorder %s17, 3
      %p190 = pnand %p188, %p189
      %p191 = pneg %p190
      // Predicated region
      $region9: #{tpu_custom_call.1} parent=5 // pred_check
        _
      $region10: #{tpu_custom_call.1} parent=5 // pred_check_branch
        %193 = sbr.rel (%p190) target = $region12
      $region11: #{tpu_custom_call.1} parent=5 // pred_region
        %s194 = ssub.s32 %s17, 1
      $region12: #{tpu_custom_call.1} parent=5 // pred_fallthru
        _
      %p195 = scmp.lt.s32.totalorder %s17, 2
      // Predicated region
      $region13: #{tpu_custom_call.1} parent=5 // pred_check
        %p196 = pneg %p195
      $region14: #{tpu_custom_call.1} parent=5 // pred_check_branch
        %198 = sbr.rel (%p196) target = $region16
      $region15: #{tpu_custom_call.1} parent=5 // pred_region
        // Predicated region
        $region17: #{tpu_custom_call.1} parent=15 // pred_check
          %p199 = pneg %p60
        $region18: #{tpu_custom_call.1} parent=15 // pred_check_branch
          %201 = sbr.rel (%p199) target = $region20
        $region19: #{tpu_custom_call.1} parent=15 // pred_region
          %s202 = sand.u32 %s50, 1
          %s203 = scalar_lea.sflag [#allocation6], %s202
          %s204 = sand.u32 %s50, 1
          %s205 = smul.addr %s204, 8
          %s206 = scalar_lea.vmem [#allocation5], %s205
          %s207 = sadd.s32 %s25, %s26
          %s208 = smul.u32 2, %s207
          %s210 = ssub.s32 128, 128
          %211 = vsyncadd %s203, %s210
          %s212 = smul.addr %s24, 2
          %s213 = sadd.s32 %s208, %s212
          %s214 = smul.addr %s213, 64
          %s215 = scalar_lea.hbm %s0, %s214
          %s217 = sshll.u32 %s206, 4
          %s218 = int_to_ptr.vmem [resolvable:$true] %s217
          %220 = dma.hbm_to_vmem [thread:$0]  %s215, 128, %s218, %s203
        $region20: #{tpu_custom_call.1} parent=15 // pred_fallthru
          _
        // Predicated region
        $region21: #{tpu_custom_call.1} parent=15 // pred_check
          %p221 = pneg %p90
        $region22: #{tpu_custom_call.1} parent=15 // pred_check_branch
          %223 = sbr.rel (%p221) target = $region24
        $region23: #{tpu_custom_call.1} parent=15 // pred_region
          %s224 = sand.u32 %s80, 1
          %s225 = scalar_lea.sflag [#allocation8], %s224
          %s226 = sand.u32 %s80, 1
          %s227 = smul.addr %s226, 8
          %s228 = scalar_lea.vmem [#allocation7], %s227
          %s229 = sadd.s32 %s25, %s26
          %s230 = smul.u32 2, %s229
          %s232 = ssub.s32 128, 128
          %233 = vsyncadd %s225, %s232
          %s234 = smul.addr %s24, 2
          %s235 = sadd.s32 %s230, %s234
          %s236 = smul.addr %s235, 64
          %s237 = scalar_lea.hbm %s1, %s236
          %s239 = sshll.u32 %s228, 4
          %s240 = int_to_ptr.vmem [resolvable:$true] %s239
          %242 = dma.hbm_to_vmem [thread:$0]  %s237, 128, %s240, %s225
        $region24: #{tpu_custom_call.1} parent=15 // pred_fallthru
          _
      $region16: #{tpu_custom_call.1} parent=5 // pred_fallthru
        _
      %p243 = scmp.le.s32.totalorder 1, %s17
      %p244 = scmp.lt.s32.totalorder %s17, 3
      %p245 = pnand %p243, %p244
      %p246 = pneg %p245
      // Predicated region
      $region25: #{tpu_custom_call.1} parent=5 // pred_check
        _
      $region26: #{tpu_custom_call.1} parent=5 // pred_check_branch
        %248 = sbr.rel (%p245) target = $region28
      $region27: #{tpu_custom_call.1} parent=5 // pred_region
        %s249 = ssub.s32 %s17, 1
        %s250 = sand.u32 %s53, 1
        %s251 = scalar_lea.sflag [#allocation6], %s250
        %s252 = sand.u32 %s53, 1
        %s253 = smul.addr %s252, 8
        %s254 = scalar_lea.vmem [#allocation5], %s253
        // Predicated region
        $region29: #{tpu_custom_call.1} parent=27 // pred_check
          %p255 = pneg %p66
        $region30: #{tpu_custom_call.1} parent=27 // pred_check_branch
          %257 = sbr.rel (%p255) target = $region32
        $region31: #{tpu_custom_call.1} parent=27 // pred_region
          %258 = dma.done %s251, 128
        $region32: #{tpu_custom_call.1} parent=27 // pred_fallthru
          _
        %s259 = sand.u32 %s83, 1
        %s260 = scalar_lea.sflag [#allocation8], %s259
        %s261 = sand.u32 %s83, 1
        %s262 = smul.addr %s261, 8
        %s263 = scalar_lea.vmem [#allocation7], %s262
        // Predicated region
        $region33: #{tpu_custom_call.1} parent=27 // pred_check
          %p264 = pneg %p96
        $region34: #{tpu_custom_call.1} parent=27 // pred_check_branch
          %266 = sbr.rel (%p264) target = $region36
        $region35: #{tpu_custom_call.1} parent=27 // pred_region
          %267 = dma.done %s260, 128
        $region36: #{tpu_custom_call.1} parent=27 // pred_fallthru
          _
        %s268 = sand.u32 %s53, 1
        %s269 = scalar_lea.sflag [#allocation6], %s268
        %s270 = sand.u32 %s53, 1
        %s271 = smul.addr %s270, 8
        %s272 = scalar_lea.vmem [#allocation5], %s271
        %p273 = pneg %p66
        %p274 = pneg %p63
        %s275 = sand.u32 %s83, 1
        %s276 = scalar_lea.sflag [#allocation8], %s275
        %s277 = sand.u32 %s83, 1
        %s278 = smul.addr %s277, 8
        %s279 = scalar_lea.vmem [#allocation7], %s278
        %p280 = pneg %p96
        %p281 = pneg %p93
        %p282 = pneg %p124
        %p283 = pneg %p121
        %p284 = scmp.lt.s32.totalorder %s27, 1
        %s285 = scalar_select %p284, %s27, 1
        %p286 = scmp.lt.s32.totalorder %s28, 0
        %s287 = scalar_select %p286, %s28, 0
        %s288 = sadd.s32 %s287, %s285
        %s289 = scalar_lea.vmem %s2, %s288
        %p290 = pneg %p152
        %p291 = pneg %p149
        %p292 = scmp.lt.s32.totalorder %s27, 1
        %s293 = scalar_select %p292, %s27, 1
        %p294 = scmp.lt.s32.totalorder %s28, 0
        %s295 = scalar_select %p294, %s28, 0
        %s296 = sadd.s32 %s295, %s293
        %s297 = scalar_lea.vmem %s3, %s296
        %p298 = pneg %p180
        %p299 = pneg %p177
        %p300 = scmp.lt.s32.totalorder %s27, 1
        %s301 = scalar_select %p300, %s27, 1
        %p302 = scmp.lt.s32.totalorder %s28, 0
        %s303 = scalar_select %p302, %s28, 0
        %s304 = sadd.s32 %s303, %s301
        %s305 = scalar_lea.vmem %s4, %s304
        %s306 = sadd.s32 %s28, %s29
        %s307 = smul.u32 2, %s306
        %s308 = sadd.s32 %s28, %s29
        %s309 = smul.u32 2, %s308
        %p310 = scmp.lt.s32.totalorder %s27, 1
        %s311 = scalar_select %p310, %s27, 1
        %p312 = scmp.lt.s32.totalorder %s28, 0
        %s313 = scalar_select %p312, %s28, 0
        %s314 = sadd.s32 %s313, %s311
        %s315 = scalar_lea.vmem %s2, %s314
        %p316 = scmp.lt.s32.totalorder %s27, 1
        %s317 = scalar_select %p316, %s27, 1
        %p318 = scmp.lt.s32.totalorder %s28, 0
        %s319 = scalar_select %p318, %s28, 0
        %s320 = sadd.s32 %s319, %s317
        %s321 = scalar_lea.vmem %s3, %s320
        %p322 = scmp.lt.s32.totalorder %s27, 1
        %s323 = scalar_select %p322, %s27, 1
        %p324 = scmp.lt.s32.totalorder %s28, 0
        %s325 = scalar_select %p324, %s28, 0
        %s326 = sadd.s32 %s325, %s323
        %s327 = scalar_lea.vmem %s4, %s326
        %p328 = scmp.eq.s32.totalorder %s29, 0
        // Predicated region
        $region37: #{tpu_custom_call.1} parent=27 // pred_check
          %p329 = pneg %p328
        $region38: #{tpu_custom_call.1} parent=27 // pred_check_branch
          %331 = sbr.rel (%p329) target = $region40
        $region39: #{tpu_custom_call.1} parent=27 // pred_region
          %v332 = vlaneseq
          %vm333 = vcmp.ge.s32.totalorder %v332, 0
          %vm334 = vcmp.lt.s32.totalorder %v332, 256
          %vm335 = vmand %vm333, %vm334
          %336 = vst.msk [vmem:[#allocation2] sm:$0x3] %vm335, 0.0
          %337 = vst.msk [vmem:[#allocation3] sm:$0x3] %vm335, 0.0
          %338 = vst.msk [vmem:[#allocation4] sm:$0x3] %vm335, 0.0
        $region40: #{tpu_custom_call.1} parent=27 // pred_fallthru
          _
        %v339 = vld [vmem:[%s254] sm:$0xff]
        %v340 = vld [vmem:[%s263] sm:$0xff]
        %v341 = vsub.f32 %v339, %v340
        %v342 = vmul.f32 %v341, %v341
        %v344 = vcombine.high %v342, %v342
        %vm346 = vcmask 1043456
        %v347 = vsel %vm346, %v342, 0.0
        %v348 = vrot.slane %v347, 4
        %v349 = vadd.f32 %v347, %v348
        %v350 = vrot.slane %v349, 2
        %v351 = vadd.f32 %v349, %v350
        %v352 = vrot.slane %v351, 1
        %v353 = vadd.f32 %v351, %v352
        %v354 = vsel %vm346, %v344, 0.0
        %v355 = vrot.slane %v354, 4
        %v356 = vadd.f32 %v354, %v355
        %v357 = vrot.slane %v356, 2
        %v358 = vadd.f32 %v356, %v357
        %v359 = vrot.slane %v358, 1
        %v360 = vadd.f32 %v358, %v359
        %v362 = vcombine.high %v339, %v339
        %v364 = vsel %vm346, %v339, -inf
        %v365 = vrot.slane %v364, 4
        %v366 = vmax.f32 %v364, %v365
        %v367 = vrot.slane %v366, 2
        %v368 = vmax.f32 %v366, %v367
        %v369 = vrot.slane %v368, 1
        %v370 = vmax.f32 %v368, %v369
        %v371 = vsel %vm346, %v362, -inf
        %v372 = vrot.slane %v371, 4
        %v373 = vmax.f32 %v371, %v372
        %v374 = vrot.slane %v373, 2
        %v375 = vmax.f32 %v373, %v374
        %v376 = vrot.slane %v375, 1
        %v377 = vmax.f32 %v375, %v376
        %v379 = vcombine.high %v340, %v340
        %v381 = vsel %vm346, %v340, -inf
        %v382 = vrot.slane %v381, 4
        %v383 = vmax.f32 %v381, %v382
        %v384 = vrot.slane %v383, 2
        %v385 = vmax.f32 %v383, %v384
        %v386 = vrot.slane %v385, 1
        %v387 = vmax.f32 %v385, %v386
        %v388 = vsel %vm346, %v379, -inf
        %v389 = vrot.slane %v388, 4
        %v390 = vmax.f32 %v388, %v389
        %v391 = vrot.slane %v390, 2
        %v392 = vmax.f32 %v390, %v391
        %v393 = vrot.slane %v392, 1
        %v394 = vmax.f32 %v392, %v393
        %v397 = vcombine.low %v370, %v377
        %v399 = vsub.f32 %v339, %v397
        %v402 = vcombine.low %v387, %v394
        %v404 = vsub.f32 %v340, %v402
        %v405 = vmul.f32 %v399, 0.5
        %v406 = vmul.f32 %v405, 1.442695
        %v407 = vpow.pop %v406
        %v408 = vmul.f32 %v404, 0.5
        %v409 = vmul.f32 %v408, 1.442695
        %v410 = vpow.pop %v409
        %v412 = vcombine.high %v407, %v407
        %v414 = vsel %vm346, %v407, 0.0
        %v415 = vrot.slane %v414, 4
        %v416 = vadd.f32 %v414, %v415
        %v417 = vrot.slane %v416, 2
        %v418 = vadd.f32 %v416, %v417
        %v419 = vrot.slane %v418, 1
        %v420 = vadd.f32 %v418, %v419
        %v421 = vsel %vm346, %v412, 0.0
        %v422 = vrot.slane %v421, 4
        %v423 = vadd.f32 %v421, %v422
        %v424 = vrot.slane %v423, 2
        %v425 = vadd.f32 %v423, %v424
        %v426 = vrot.slane %v425, 1
        %v427 = vadd.f32 %v425, %v426
        %v429 = vcombine.high %v410, %v410
        %v431 = vsel %vm346, %v410, 0.0
        %v432 = vrot.slane %v431, 4
        %v433 = vadd.f32 %v431, %v432
        %v434 = vrot.slane %v433, 2
        %v435 = vadd.f32 %v433, %v434
        %v436 = vrot.slane %v435, 1
        %v437 = vadd.f32 %v435, %v436
        %v438 = vsel %vm346, %v429, 0.0
        %v439 = vrot.slane %v438, 4
        %v440 = vadd.f32 %v438, %v439
        %v441 = vrot.slane %v440, 2
        %v442 = vadd.f32 %v440, %v441
        %v443 = vrot.slane %v442, 1
        %v444 = vadd.f32 %v442, %v443
        %v447 = vcombine.low %v437, %v444
        %v449 = vrcp.pop %v447
        %v450 = vmul.f32 %v410, %v449
        %v451 = vsub.f32 %v370, %v387
        %v452 = vsub.f32 %v377, %v394
        %v453 = vmul.f32 %v451, 0.5
        %v454 = vmul.f32 %v452, 0.5
        %v455 = vlog2.pop %v420
        %v456 = vmul.f32 %v455, 0.6931472
        %v457 = vlog2.pop %v427
        %v458 = vmul.f32 %v457, 0.6931472
        %v459 = vadd.f32 %v453, %v456
        %v460 = vadd.f32 %v454, %v458
        %v461 = vlog2.pop %v437
        %v462 = vmul.f32 %v461, 0.6931472
        %v463 = vlog2.pop %v444
        %v464 = vmul.f32 %v463, 0.6931472
        %v465 = vsub.f32 %v459, %v462
        %v466 = vsub.f32 %v460, %v464
        %v467 = vmul.f32 %v450, %v341
        %v469 = vcombine.high %v467, %v467
        %v471 = vsel %vm346, %v467, 0.0
        %v472 = vrot.slane %v471, 4
        %v473 = vadd.f32 %v471, %v472
        %v474 = vrot.slane %v473, 2
        %v475 = vadd.f32 %v473, %v474
        %v476 = vrot.slane %v475, 1
        %v477 = vadd.f32 %v475, %v476
        %v478 = vsel %vm346, %v469, 0.0
        %v479 = vrot.slane %v478, 4
        %v480 = vadd.f32 %v478, %v479
        %v481 = vrot.slane %v480, 2
        %v482 = vadd.f32 %v480, %v481
        %v483 = vrot.slane %v482, 1
        %v484 = vadd.f32 %v482, %v483
        %v485 = vmul.f32 %v477, 0.5
        %v486 = vmul.f32 %v484, 0.5
        %v487 = vsub.f32 %v465, %v485
        %v488 = vsub.f32 %v466, %v486
        %v489 = vmul.f32 %v407, %v407
        %v491 = vcombine.high %v489, %v489
        %v493 = vsel %vm346, %v489, 0.0
        %v494 = vrot.slane %v493, 4
        %v495 = vadd.f32 %v493, %v494
        %v496 = vrot.slane %v495, 2
        %v497 = vadd.f32 %v495, %v496
        %v498 = vrot.slane %v497, 1
        %v499 = vadd.f32 %v497, %v498
        %v500 = vsel %vm346, %v491, 0.0
        %v501 = vrot.slane %v500, 4
        %v502 = vadd.f32 %v500, %v501
        %v503 = vrot.slane %v502, 2
        %v504 = vadd.f32 %v502, %v503
        %v505 = vrot.slane %v504, 1
        %v506 = vadd.f32 %v504, %v505
        %v507 = vlog2.pop %v499
        %v508 = vmul.f32 %v507, 0.6931472
        %v509 = vlog2.pop %v506
        %v510 = vmul.f32 %v509, 0.6931472
        %v511 = vlaneseq
        %v512 = vshrl.u32 %v511, 7
        %vm513 = vcmp.eq.f32.partialorder %v340, %v402
        %v515 = vunpack.c.l.s4 839922192
        %v516 = vunpack.c.0.s8 %v515
        %v517 = vlaneseq
        %v518 = vshrl.u32 %v517, 7
        %v519 = vsub.s32 %v516, %v518
        %v520 = vrot.slane %v512, %v519
        %v521 = vsel %vm513, %v520, 4
        %v522 = vcombine.high %v521, %v521
        %v523 = vsel %vm346, %v521, 2147483647
        %v524 = vrot.slane %v523, 4
        %vm525 = vcmp.lt.s32.totalorder %v523, %v524
        %v526 = vsel %vm525, %v523, %v524
        %v527 = vrot.slane %v526, 2
        %vm528 = vcmp.lt.s32.totalorder %v526, %v527
        %v529 = vsel %vm528, %v526, %v527
        %v530 = vrot.slane %v529, 1
        %vm531 = vcmp.lt.s32.totalorder %v529, %v530
        %v532 = vsel %vm531, %v529, %v530
        %v533 = vsel %vm346, %v522, 2147483647
        %v534 = vrot.slane %v533, 4
        %vm535 = vcmp.lt.s32.totalorder %v533, %v534
        %v536 = vsel %vm535, %v533, %v534
        %v537 = vrot.slane %v536, 2
        %vm538 = vcmp.lt.s32.totalorder %v536, %v537
        %v539 = vsel %vm538, %v536, %v537
        %v540 = vrot.slane %v539, 1
        %vm541 = vcmp.lt.s32.totalorder %v539, %v540
        %v542 = vsel %vm541, %v539, %v540
        %vm543 = vcmp.eq.s32.totalorder %v512, %v532
        %vm544 = vcmp.eq.s32.totalorder %v512, %v542
        %v545 = vsel %vm543, 1, 0
        %v546 = vsel %vm544, 1, 0
        %v547 = vcvt.s32.f32 %v545
        %v548 = vcvt.s32.f32 %v546
        %v551 = vcombine.low %v547, %v548
        %v553 = vmul.f32 %v399, %v551
        %v555 = vcombine.high %v553, %v553
        %v557 = vsel %vm346, %v553, 0.0
        %v558 = vrot.slane %v557, 4
        %v559 = vadd.f32 %v557, %v558
        %v560 = vrot.slane %v559, 2
        %v561 = vadd.f32 %v559, %v560
        %v562 = vrot.slane %v561, 1
        %v563 = vadd.f32 %v561, %v562
        %v564 = vsel %vm346, %v555, 0.0
        %v565 = vrot.slane %v564, 4
        %v566 = vadd.f32 %v564, %v565
        %v567 = vrot.slane %v566, 2
        %v568 = vadd.f32 %v566, %v567
        %v569 = vrot.slane %v568, 1
        %v570 = vadd.f32 %v568, %v569
        %v571 = vsub.f32 %v563, %v508
        %v572 = vsub.f32 %v570, %v510
        %v573 = vmul.f32 %v571, 1.442695
        %v574 = vpow.pop %v573
        %v575 = vmul.f32 %v572, 1.442695
        %v576 = vpow.pop %v575
        %v577 = vsub.f32 1.0, %v574
        %v578 = vsub.f32 1.0, %v576
        %v579 = vmul.f32 %v577, %v577
        %v580 = vmul.f32 %v578, %v578
        %v581 = vmul.f32 %v579, -0.25
        %v582 = vmul.f32 %v580, -0.25
        %v583 = vmul.f32 %v581, %v571
        %v584 = vmul.f32 %v582, %v572
        %v585 = vld [vmem:[#allocation2] sm:$0x3]
        %v588 = vcombine.low %v353, %v360
        %v590 = vunpack.c.l.s4 1966171168
        %v591 = vunpack.c.0.s8 %v590
        %v592 = vlaneseq
        %v593 = vshrl.u32 %v592, 7
        %v594 = vsub.s32 %v591, %v593
        %v595 = vrot.slane %v588, %v594
        %v597 = vunpack.c.l.s4 1966171168
        %v598 = vunpack.c.0.s8 %v597
        %v599 = vlaneseq
        %v600 = vshrl.u32 %v599, 7
        %v601 = vsub.s32 %v598, %v600
        %v602 = vrot.slane %v595, %v601
        %v604 = vadd.f32 %v585, %v602
        %v605 = vlaneseq
        %vm606 = vcmp.ge.s32.totalorder %v605, 0
        %vm607 = vcmp.lt.s32.totalorder %v605, 256
        %vm608 = vmand %vm606, %vm607
        %609 = vst.msk [vmem:[#allocation2] sm:$0x3] %vm608, %v604
        %v610 = vld [vmem:[#allocation3] sm:$0x3]
        %v613 = vcombine.low %v487, %v488
        %v615 = vunpack.c.l.s4 1966171168
        %v616 = vunpack.c.0.s8 %v615
        %v617 = vlaneseq
        %v618 = vshrl.u32 %v617, 7
        %v619 = vsub.s32 %v616, %v618
        %v620 = vrot.slane %v613, %v619
        %v622 = vunpack.c.l.s4 1966171168
        %v623 = vunpack.c.0.s8 %v622
        %v624 = vlaneseq
        %v625 = vshrl.u32 %v624, 7
        %v626 = vsub.s32 %v623, %v625
        %v627 = vrot.slane %v620, %v626
        %v629 = vadd.f32 %v610, %v627
        %630 = vst.msk [vmem:[#allocation3] sm:$0x3] %vm608, %v629
        %v631 = vld [vmem:[#allocation4] sm:$0x3]
        %v634 = vcombine.low %v583, %v584
        %v636 = vunpack.c.l.s4 1966171168
        %v637 = vunpack.c.0.s8 %v636
        %v638 = vlaneseq
        %v639 = vshrl.u32 %v638, 7
        %v640 = vsub.s32 %v637, %v639
        %v641 = vrot.slane %v634, %v640
        %v643 = vunpack.c.l.s4 1966171168
        %v644 = vunpack.c.0.s8 %v643
        %v645 = vlaneseq
        %v646 = vshrl.u32 %v645, 7
        %v647 = vsub.s32 %v644, %v646
        %v648 = vrot.slane %v641, %v647
        %v650 = vadd.f32 %v631, %v648
        %651 = vst.msk [vmem:[#allocation4] sm:$0x3] %vm608, %v650
        // Predicated region
        $region41: #{tpu_custom_call.1} parent=27 // pred_check
          %p652 = pneg %p328
        $region42: #{tpu_custom_call.1} parent=27 // pred_check_branch
          %654 = sbr.rel (%p652) target = $region44
        $region43: #{tpu_custom_call.1} parent=27 // pred_region
          %v655 = vld [vmem:[#allocation2] sm:$0x3]
          %v657 = vlaneseq
          %v658 = vshrl.u32 %v657, 7
          %v659 = vsub.s32 0, %v658
          %v660 = vrot.slane %v655, %v659
          %v661 = vlaneseq
          %v662 = vshrl.u32 %v661, 7
          %v663 = vsub.s32 1, %v662
          %v664 = vrot.slane %v655, %v663
          %vm667 = vcmask 1040384
          %v668 = vsel %vm667, %v660, 0.0
          %v669 = vsel %vm667, %v664, 0.0
          %v670 = vadd.f32 %v668, %v669
          %671 = vadd.xlane.f32.xlu0 %v670
          %v672 = vpop.xlane.xlu0 %671
          %v673 = vrot.slane %v672, 4
          %v674 = vadd.f32 %v672, %v673
          %v675 = vrot.slane %v674, 2
          %v676 = vadd.f32 %v674, %v675
          %v677 = vrot.slane %v676, 1
          %v678 = vadd.f32 %v676, %v677
          %s679 = vtos %v678
          %v680 = vstv %s679
          %vm681 = vcmask 0
          %682 = vst.msk [vmem:[%s315] sm:$0x1] %vm681, %v680
          %v683 = vld [vmem:[#allocation3] sm:$0x3]
          %v685 = vlaneseq
          %v686 = vshrl.u32 %v685, 7
          %v687 = vsub.s32 0, %v686
          %v688 = vrot.slane %v683, %v687
          %v689 = vlaneseq
          %v690 = vshrl.u32 %v689, 7
          %v691 = vsub.s32 1, %v690
          %v692 = vrot.slane %v683, %v691
          %v695 = vsel %vm667, %v688, 0.0
          %v696 = vsel %vm667, %v692, 0.0
          %v697 = vadd.f32 %v695, %v696
          %698 = vadd.xlane.f32.xlu0 %v697
          %v699 = vpop.xlane.xlu0 %698
          %v700 = vrot.slane %v699, 4
          %v701 = vadd.f32 %v699, %v700
          %v702 = vrot.slane %v701, 2
          %v703 = vadd.f32 %v701, %v702
          %v704 = vrot.slane %v703, 1
          %v705 = vadd.f32 %v703, %v704
          %s706 = vtos %v705
          %v707 = vstv %s706
          %708 = vst.msk [vmem:[%s321] sm:$0x1] %vm681, %v707
          %v709 = vld [vmem:[#allocation4] sm:$0x3]
          %v711 = vlaneseq
          %v712 = vshrl.u32 %v711, 7
          %v713 = vsub.s32 0, %v712
          %v714 = vrot.slane %v709, %v713
          %v715 = vlaneseq
          %v716 = vshrl.u32 %v715, 7
          %v717 = vsub.s32 1, %v716
          %v718 = vrot.slane %v709, %v717
          %v721 = vsel %vm667, %v714, 0.0
          %v722 = vsel %vm667, %v718, 0.0
          %v723 = vadd.f32 %v721, %v722
          %724 = vadd.xlane.f32.xlu0 %v723
          %v725 = vpop.xlane.xlu0 %724
          %v726 = vrot.slane %v725, 4
          %v727 = vadd.f32 %v725, %v726
          %v728 = vrot.slane %v727, 2
          %v729 = vadd.f32 %v727, %v728
          %v730 = vrot.slane %v729, 1
          %v731 = vadd.f32 %v729, %v730
          %s732 = vtos %v731
          %v733 = vstv %s732
          %734 = vst.msk [vmem:[%s327] sm:$0x1] %vm681, %v733
        $region44: #{tpu_custom_call.1} parent=27 // pred_fallthru
          _
        %p735 = scmp.lt.s32.totalorder %s27, 1
        %s736 = scalar_select %p735, %s27, 1
        %p737 = scmp.lt.s32.totalorder %s28, 0
        %s738 = scalar_select %p737, %s28, 0
        %s739 = sadd.s32 %s738, %s736
        %s740 = scalar_lea.vmem %s2, %s739
        %p741 = scmp.lt.s32.totalorder %s27, 1
        %s742 = scalar_select %p741, %s27, 1
        %p743 = scmp.lt.s32.totalorder %s28, 0
        %s744 = scalar_select %p743, %s28, 0
        %s745 = sadd.s32 %s744, %s742
        %s746 = scalar_lea.vmem %s3, %s745
        %p747 = scmp.lt.s32.totalorder %s27, 1
        %s748 = scalar_select %p747, %s27, 1
        %p749 = scmp.lt.s32.totalorder %s28, 0
        %s750 = scalar_select %p749, %s28, 0
        %s751 = sadd.s32 %s750, %s748
        %s752 = scalar_lea.vmem %s4, %s751
        // Predicated region
        $region45: #{tpu_custom_call.1} parent=27 // pred_check
          %p753 = pneg %p121
        $region46: #{tpu_custom_call.1} parent=27 // pred_check_branch
          %755 = sbr.rel (%p753) target = $region48
        $region47: #{tpu_custom_call.1} parent=27 // pred_region
          _
        $region48: #{tpu_custom_call.1} parent=27 // pred_fallthru
          _
        // Predicated region
        $region49: #{tpu_custom_call.1} parent=27 // pred_check
          %p756 = pneg %p149
        $region50: #{tpu_custom_call.1} parent=27 // pred_check_branch
          %758 = sbr.rel (%p756) target = $region52
        $region51: #{tpu_custom_call.1} parent=27 // pred_region
          _
        $region52: #{tpu_custom_call.1} parent=27 // pred_fallthru
          _
        // Predicated region
        $region53: #{tpu_custom_call.1} parent=27 // pred_check
          %p759 = pneg %p177
        $region54: #{tpu_custom_call.1} parent=27 // pred_check_branch
          %761 = sbr.rel (%p759) target = $region56
        $region55: #{tpu_custom_call.1} parent=27 // pred_region
          _
        $region56: #{tpu_custom_call.1} parent=27 // pred_fallthru
          _
      $region28: #{tpu_custom_call.1} parent=5 // pred_fallthru
        _
      %p762 = scmp.le.s32.totalorder 2, %s17
      // Predicated region
      $region57: #{tpu_custom_call.1} parent=5 // pred_check
        %p763 = pneg %p762
      $region58: #{tpu_custom_call.1} parent=5 // pred_check_branch
        %765 = sbr.rel (%p763) target = $region60
      $region59: #{tpu_custom_call.1} parent=5 // pred_region
        %s766 = ssub.s32 %s17, 2
        // Predicated region
        $region61: #{tpu_custom_call.1} parent=59 // pred_check
          %p767 = pneg %p127
        $region62: #{tpu_custom_call.1} parent=59 // pred_check_branch
          %769 = sbr.rel (%p767) target = $region64
        $region63: #{tpu_custom_call.1} parent=59 // pred_region
          %p770 = scmp.lt.s32.totalorder %s30, 1
          %s771 = scalar_select %p770, %s30, 1
          %p772 = scmp.lt.s32.totalorder %s31, 0
          %s773 = scalar_select %p772, %s31, 0
          %s774 = sadd.s32 %s773, %s771
          %s775 = scalar_lea.vmem %s2, %s774
        $region64: #{tpu_custom_call.1} parent=59 // pred_fallthru
          _
        // Predicated region
        $region65: #{tpu_custom_call.1} parent=59 // pred_check
          %p776 = pneg %p155
        $region66: #{tpu_custom_call.1} parent=59 // pred_check_branch
          %778 = sbr.rel (%p776) target = $region68
        $region67: #{tpu_custom_call.1} parent=59 // pred_region
          %p779 = scmp.lt.s32.totalorder %s30, 1
          %s780 = scalar_select %p779, %s30, 1
          %p781 = scmp.lt.s32.totalorder %s31, 0
          %s782 = scalar_select %p781, %s31, 0
          %s783 = sadd.s32 %s782, %s780
          %s784 = scalar_lea.vmem %s3, %s783
        $region68: #{tpu_custom_call.1} parent=59 // pred_fallthru
          _
        // Predicated region
        $region69: #{tpu_custom_call.1} parent=59 // pred_check
          %p785 = pneg %p183
        $region70: #{tpu_custom_call.1} parent=59 // pred_check_branch
          %787 = sbr.rel (%p785) target = $region72
        $region71: #{tpu_custom_call.1} parent=59 // pred_region
          %p788 = scmp.lt.s32.totalorder %s30, 1
          %s789 = scalar_select %p788, %s30, 1
          %p790 = scmp.lt.s32.totalorder %s31, 0
          %s791 = scalar_select %p790, %s31, 0
          %s792 = sadd.s32 %s791, %s789
          %s793 = scalar_lea.vmem %s4, %s792
        $region72: #{tpu_custom_call.1} parent=59 // pred_fallthru
          _
      $region60: #{tpu_custom_call.1} parent=5 // pred_fallthru
        _
    $region6: #{tpu_custom_call.1} parent=1 // loop_footer
      %s21 = sadd.s32 1, %s17
    $region7: #{tpu_custom_call.1} parent=1 // loop_footer_branch
      %16 = sbr.rel target = $region3
    $region8: #{tpu_custom_call.1} parent=1 // loop_exit
      _
    %794 = vsyncpa [#allocation6], 1
    %s795 = scalar_lea.sflag [#allocation6], 1
    %796 = vsyncpa %s795, 1
    %797 = vsyncpa [#allocation8], 1
    %s798 = scalar_lea.sflag [#allocation8], 1
    %799 = vsyncpa %s798, 1

</llo_original>
